<compile_context>
chip_gen: v7x
topology: tpu7x:2x2x1
jax: 0.10.0
libtpu: 0.0.40
codegen_flags: <defaults>
</compile_context>

<pallas_src>
import functools

import jax
import jax.numpy as jnp
from jax.experimental import pallas as pl
from jax.experimental.pallas import tpu as pltpu

C = 3          # fixed by the module (Conv2d(3, 3, 1))
LANE = 128
MAX_TILE_S = 512   # 512*128*4B = 256 KiB per channel slab -> small, pipeline-friendly


def _plan_tiling(hw):
    """Return (S_padded, TILE_S) so the (TILE_S, 128) block is always legal."""
    s = -(-hw // LANE)                 # ceil(HW / 128)
    if s <= MAX_TILE_S:
        return s, s                    # single spatial tile == full dim (always legal)
    s = -(-s // 8) * 8                 # make S a multiple of 8 for dense (8k,128) tiles
    tile = MAX_TILE_S
    while s % tile != 0:
        tile -= 8
    return s, tile


def _fused_kernel(x_ref, w_ref, shift_ref, out_ref, val_sc, idx_sc,
                  *, hw, tile_s, masked):
    # x_ref    : (1, C, TILE_S, 128) f32  VMEM  current (batch, spatial-tile) block
    # w_ref    : (C*C,)             f32  SMEM  BN-folded 1x1 conv weights, row-major
    # shift_ref: (C,)               f32  SMEM  folded BN shift (includes conv bias)
    # out_ref  : (1,)               i32  SMEM  flat NCHW argmax index
    # val_sc   : (C, TILE_S, 128)   f32  VMEM  running elementwise best value
    # idx_sc   : (C, TILE_S, 128)   i32  VMEM  running elementwise best flat index
    n = pl.program_id(0)
    t = pl.program_id(1)
    n_last = pl.num_programs(0) - 1
    t_last = pl.num_programs(1) - 1

    @pl.when(jnp.logical_and(n == 0, t == 0))
    def _():
        val_sc[...] = jnp.full(val_sc.shape, -jnp.inf, val_sc.dtype)
        idx_sc[...] = jnp.zeros(idx_sc.shape, idx_sc.dtype)

    # Tile-local flat spatial offsets (constant across channels and grid steps).
    local = (jax.lax.broadcasted_iota(jnp.int32, (tile_s, LANE), 0) * LANE
             + jax.lax.broadcasted_iota(jnp.int32, (tile_s, LANE), 1))
    hw_idx = local + t * (tile_s * LANE)          # position within the (padded) image

    xs = [x_ref[0, k, :, :] for k in range(C)]    # per-channel (TILE_S, 128) slabs

    for c in range(C):
        # 1x1 conv channel mix via VPU broadcast MACs (BN scale already folded in w).
        z = w_ref[c * C] * xs[0]
        for k in range(1, C):
            z = z + w_ref[c * C + k] * xs[k]
        y = jnp.maximum(z + shift_ref[c], 0.0)    # folded-BN shift + ReLU
        if masked:
            # Kill spatial padding so it can never win the argmax.
            y = jnp.where(hw_idx < hw, y, -jnp.inf)

        # Flat NCHW index of each element in this tile.
        gidx = hw_idx + (n * (C * hw) + c * hw)

        cur_v = val_sc[c]
        cur_i = idx_sc[c]
        upd = y > cur_v                           # strict >: keeps earliest occurrence
        val_sc[c] = jnp.where(upd, y, cur_v)
        idx_sc[c] = jnp.where(upd, gidx, cur_i)

    @pl.when(jnp.logical_and(n == n_last, t == t_last))
    def _():
        # One cross-lane reduction for the whole problem (torch first-max tie rule:
        # stored indices are per-position earliest, min over ties gives global first).
        v = val_sc[...]
        m = jnp.max(v)
        big = jnp.iinfo(jnp.int32).max
        out_ref[0] = jnp.min(jnp.where(v == m, idx_sc[...], big))


def model_forward(x_nchw, conv_w, conv_b, bn_gamma, bn_beta, bn_mean, bn_var,
                  eps=1e-5):
    """Returns the flat NCHW argmax index (int32 scalar), like torch.argmax."""
    N, Cin, H, W = x_nchw.shape
    assert Cin == C
    HW = H * W

    # Fold BN (eval mode) into the 1x1 conv: y = (scale*W) @ x + shift.
    scale = bn_gamma / jnp.sqrt(bn_var + eps)                         # (C,)
    w_eff = (scale[:, None] * conv_w.reshape(C, C)).astype(jnp.float32)   # (C, C)
    shift = (scale * (conv_b - bn_mean) + bn_beta).astype(jnp.float32)    # (C,)

    S, TILE_S = _plan_tiling(HW)
    HW_pad = S * LANE
    masked = HW_pad != HW

    x = x_nchw.reshape(N, C, HW).astype(jnp.float32)
    if masked:
        x = jnp.pad(x, ((0, 0), (0, 0), (0, HW_pad - HW)))
    x4 = x.reshape(N, C, S, LANE)                 # lane-dense layout

    kernel = functools.partial(_fused_kernel, hw=HW, tile_s=TILE_S, masked=masked)

    out = pl.pallas_call(
        kernel,
        out_shape=jax.ShapeDtypeStruct((1,), jnp.int32),
        grid_spec=pltpu.PrefetchScalarGridSpec(
            num_scalar_prefetch=0,
            grid=(N, S // TILE_S),
            in_specs=[
                pl.BlockSpec((1, C, TILE_S, LANE), lambda n, t: (n, 0, t, 0)),
                pl.BlockSpec(memory_space=pltpu.SMEM),   # w_eff flat (C*C,)
                pl.BlockSpec(memory_space=pltpu.SMEM),   # shift (C,)
            ],
            out_specs=pl.BlockSpec(memory_space=pltpu.SMEM),
            scratch_shapes=[
                pltpu.VMEM((C, TILE_S, LANE), jnp.float32),   # running best value
                pltpu.VMEM((C, TILE_S, LANE), jnp.int32),     # running best index
            ],
        ),
        compiler_params=pltpu.CompilerParams(
            # Sequential running reduction across both grid axes -> must stay arbitrary.
            dimension_semantics=("arbitrary", "arbitrary"),
            vmem_limit_bytes=32 * 1024 * 1024,
        ),
    )(x4, w_eff.reshape(C * C), shift)
    # TODO(synk): torch.argmax returns int64; int32 overflows only for N*C*H*W > 2^31-1.
    return out[0]


def _reference(x_nchw, conv_w, conv_b, bn_gamma, bn_beta, bn_mean, bn_var,
               eps=1e-5):
    """Pure-JAX reference using the identical folded math / accumulation order."""
    N, _, H, W = x_nchw.shape
    HW = H * W
    scale = bn_gamma / jnp.sqrt(bn_var + eps)
    w_eff = scale[:, None] * conv_w.reshape(C, C)
    shift = scale * (conv_b - bn_mean) + bn_beta
    x = x_nchw.reshape(N, C, HW).astype(jnp.float32)
    z = jnp.zeros((N, C, HW), jnp.float32)
    for k in range(C):
        z = z + w_eff[None, :, k:k + 1] * x[:, k:k + 1, :]
    y = jnp.maximum(z + shift[None, :, None], 0.0)
    return jnp.argmax(y.reshape(-1)).astype(jnp.int32)


if __name__ == "__main__":
    key = jax.random.PRNGKey(0)
    k_x, k_w, k_b, k_g, k_be, k_m, k_v = jax.random.split(key, 7)

    N, H, W = 2, 16, 16
    x = jax.random.normal(k_x, (N, C, H, W), dtype=jnp.float32)

    # Deterministic synthetic parameters for Conv2d(3,3,1) + BatchNorm2d(3).
    conv_w = jax.random.normal(k_w, (C, C, 1, 1), dtype=jnp.float32) * 0.5
    conv_b = jax.random.normal(k_b, (C,), dtype=jnp.float32) * 0.1
    bn_gamma = 1.0 + 0.1 * jax.random.normal(k_g, (C,), dtype=jnp.float32)
    bn_beta = 0.1 * jax.random.normal(k_be, (C,), dtype=jnp.float32)
    bn_mean = 0.1 * jax.random.normal(k_m, (C,), dtype=jnp.float32)
    bn_var = 1.0 + 0.1 * jax.random.uniform(k_v, (C,), dtype=jnp.float32)

    idx = model_forward(x, conv_w, conv_b, bn_gamma, bn_beta, bn_mean, bn_var)
    idx = jax.block_until_ready(idx)

    ref = _reference(x, conv_w, conv_b, bn_gamma, bn_beta, bn_mean, bn_var)
    assert int(idx) == int(ref), f"mismatch: pallas={int(idx)} ref={int(ref)}"

    print("KERNEL_OK")
</pallas_src>

<mosaic_0001>
module attributes {stable_mosaic.version = 11 : i64} {
  func.func @_fused_kernel(%arg0: i32, %arg1: i32, %arg2: memref<1x3x2x128xf32, #tpu.memory_space<vmem>>, %arg3: memref<9xf32, #tpu.memory_space<smem>>, %arg4: memref<3xf32, #tpu.memory_space<smem>>, %arg5: memref<1xi32, #tpu.memory_space<smem>>, %arg6: memref<3x2x128xf32, #tpu.memory_space<vmem>>, %arg7: memref<3x2x128xi32, #tpu.memory_space<vmem>>) attributes {dimension_semantics = [#tpu.dimension_semantics<arbitrary>, #tpu.dimension_semantics<arbitrary>], iteration_bounds = array<i64: 2, 1>, scalar_prefetch = 0 : i64, scratch_operands = 2 : i64, tpu.core_type = #tpu.core_type<tc>, window_params = [{transform_indices = @transform_0, window_bounds = array<i64: 1, 3, 2, 128>}, {transform_indices = @transform_1, window_bounds = array<i64: 9>}, {transform_indices = @transform_2, window_bounds = array<i64: 3>}, {transform_indices = @transform_3, window_bounds = array<i64: 1>}]} {
    %c0_i32 = arith.constant 0 : i32
    %0 = arith.cmpi eq, %arg0, %c0_i32 : i32
    %c0_i32_0 = arith.constant 0 : i32
    %1 = arith.cmpi eq, %arg1, %c0_i32_0 : i32
    %2 = arith.andi %0, %1 : i1
    %3 = arith.extui %2 : i1 to i32
    %c0_i32_1 = arith.constant 0 : i32
    %4 = arith.cmpi ne, %3, %c0_i32_1 : i32
    scf.if %4 {
      %cst_61 = arith.constant 0xFF800000 : f32
      %123 = vector.broadcast %cst_61 : f32 to vector<3x2x128xf32>
      %c0_62 = arith.constant 0 : index
      %c0_63 = arith.constant 0 : index
      %c0_64 = arith.constant 0 : index
      %124 = vector.load %arg6[%c0_62, %c0_63, %c0_64] : memref<3x2x128xf32, #tpu.memory_space<vmem>>, vector<3x2x128xf32>
      tpu.vector_store %arg6[%c0_62, %c0_63, %c0_64], %123 {strides = array<i32>} : memref<3x2x128xf32, #tpu.memory_space<vmem>>, vector<3x2x128xf32>,
      %c0_i32_65 = arith.constant 0 : i32
      %125 = vector.broadcast %c0_i32_65 : i32 to vector<3x2x128xi32>
      %c0_66 = arith.constant 0 : index
      %c0_67 = arith.constant 0 : index
      %c0_68 = arith.constant 0 : index
      %126 = vector.load %arg7[%c0_66, %c0_67, %c0_68] : memref<3x2x128xi32, #tpu.memory_space<vmem>>, vector<3x2x128xi32>
      tpu.vector_store %arg7[%c0_66, %c0_67, %c0_68], %125 {strides = array<i32>} : memref<3x2x128xi32, #tpu.memory_space<vmem>>, vector<3x2x128xi32>,
    } else {
    }
    %5 = tpu.iota {dimensions = array<i32: 0>} : vector<2x128xi32>
    %c128_i32 = arith.constant 128 : i32
    %6 = vector.broadcast %c128_i32 : i32 to vector<2x128xi32>
    %7 = arith.muli %5, %6 : vector<2x128xi32>
    %8 = tpu.iota {dimensions = array<i32: 1>} : vector<2x128xi32>
    %9 = arith.addi %7, %8 : vector<2x128xi32>
    %c256_i32 = arith.constant 256 : i32
    %10 = arith.muli %arg1, %c256_i32 : i32
    %11 = vector.broadcast %10 : i32 to vector<2x128xi32>
    %12 = arith.addi %9, %11 : vector<2x128xi32>
    %c0 = arith.constant 0 : index
    %c0_2 = arith.constant 0 : index
    %c0_3 = arith.constant 0 : index
    %c0_4 = arith.constant 0 : index
    %13 = vector.load %arg2[%c0, %c0_2, %c0_3, %c0_4] : memref<1x3x2x128xf32, #tpu.memory_space<vmem>>, vector<1x1x2x128xf32>
    %14 = vector.shape_cast %13 : vector<1x1x2x128xf32> to vector<2x128xf32>
    %c0_5 = arith.constant 0 : index
    %c1 = arith.constant 1 : index
    %c0_6 = arith.constant 0 : index
    %c0_7 = arith.constant 0 : index
    %15 = vector.load %arg2[%c0_5, %c1, %c0_6, %c0_7] : memref<1x3x2x128xf32, #tpu.memory_space<vmem>>, vector<1x1x2x128xf32>
    %16 = vector.shape_cast %15 : vector<1x1x2x128xf32> to vector<2x128xf32>
    %c0_8 = arith.constant 0 : index
    %c2 = arith.constant 2 : index
    %c0_9 = arith.constant 0 : index
    %c0_10 = arith.constant 0 : index
    %17 = vector.load %arg2[%c0_8, %c2, %c0_9, %c0_10] : memref<1x3x2x128xf32, #tpu.memory_space<vmem>>, vector<1x1x2x128xf32>
    %18 = vector.shape_cast %17 : vector<1x1x2x128xf32> to vector<2x128xf32>
    %c0_11 = arith.constant 0 : index
    %19 = memref.load %arg3[%c0_11] : memref<9xf32, #tpu.memory_space<smem>>
    %20 = vector.broadcast %19 : f32 to vector<2x128xf32>
    %21 = arith.mulf %20, %14 : vector<2x128xf32>
    %c1_12 = arith.constant 1 : index
    %22 = memref.load %arg3[%c1_12] : memref<9xf32, #tpu.memory_space<smem>>
    %23 = vector.broadcast %22 : f32 to vector<2x128xf32>
    %24 = arith.mulf %23, %16 : vector<2x128xf32>
    %25 = arith.addf %21, %24 : vector<2x128xf32>
    %c2_13 = arith.constant 2 : index
    %26 = memref.load %arg3[%c2_13] : memref<9xf32, #tpu.memory_space<smem>>
    %27 = vector.broadcast %26 : f32 to vector<2x128xf32>
    %28 = arith.mulf %27, %18 : vector<2x128xf32>
    %29 = arith.addf %25, %28 : vector<2x128xf32>
    %c0_14 = arith.constant 0 : index
    %30 = memref.load %arg4[%c0_14] : memref<3xf32, #tpu.memory_space<smem>>
    %31 = vector.broadcast %30 : f32 to vector<2x128xf32>
    %32 = arith.addf %29, %31 : vector<2x128xf32>
    %cst = arith.constant 0.000000e+00 : f32
    %33 = vector.broadcast %cst : f32 to vector<2x128xf32>
    %34 = arith.maximumf %32, %33 : vector<2x128xf32>
    %c768_i32 = arith.constant 768 : i32
    %35 = arith.muli %arg0, %c768_i32 : i32
    %c0_i32_15 = arith.constant 0 : i32
    %36 = arith.addi %35, %c0_i32_15 : i32
    %37 = vector.broadcast %36 : i32 to vector<2x128xi32>
    %38 = arith.addi %12, %37 : vector<2x128xi32>
    %c0_16 = arith.constant 0 : index
    %c0_17 = arith.constant 0 : index
    %c0_18 = arith.constant 0 : index
    %39 = vector.load %arg6[%c0_16, %c0_17, %c0_18] : memref<3x2x128xf32, #tpu.memory_space<vmem>>, vector<1x2x128xf32>
    %40 = vector.shape_cast %39 : vector<1x2x128xf32> to vector<2x128xf32>
    %c0_19 = arith.constant 0 : index
    %c0_20 = arith.constant 0 : index
    %c0_21 = arith.constant 0 : index
    %41 = vector.load %arg7[%c0_19, %c0_20, %c0_21] : memref<3x2x128xi32, #tpu.memory_space<vmem>>, vector<1x2x128xi32>
    %42 = vector.shape_cast %41 : vector<1x2x128xi32> to vector<2x128xi32>
    %43 = arith.cmpf ogt, %34, %40 : vector<2x128xf32>
    %44 = arith.select %43, %34, %40 : vector<2x128xi1>, vector<2x128xf32>
    %c0_22 = arith.constant 0 : index
    %c0_23 = arith.constant 0 : index
    %c0_24 = arith.constant 0 : index
    %45 = vector.load %arg6[%c0_22, %c0_23, %c0_24] : memref<3x2x128xf32, #tpu.memory_space<vmem>>, vector<1x2x128xf32>
    %46 = vector.shape_cast %45 : vector<1x2x128xf32> to vector<2x128xf32>
    %47 = vector.shape_cast %44 : vector<2x128xf32> to vector<1x2x128xf32>
    tpu.vector_store %arg6[%c0_22, %c0_23, %c0_24], %47 {strides = array<i32>} : memref<3x2x128xf32, #tpu.memory_space<vmem>>, vector<1x2x128xf32>,
    %48 = arith.select %43, %38, %42 : vector<2x128xi1>, vector<2x128xi32>
    %c0_25 = arith.constant 0 : index
    %c0_26 = arith.constant 0 : index
    %c0_27 = arith.constant 0 : index
    %49 = vector.load %arg7[%c0_25, %c0_26, %c0_27] : memref<3x2x128xi32, #tpu.memory_space<vmem>>, vector<1x2x128xi32>
    %50 = vector.shape_cast %49 : vector<1x2x128xi32> to vector<2x128xi32>
    %51 = vector.shape_cast %48 : vector<2x128xi32> to vector<1x2x128xi32>
    tpu.vector_store %arg7[%c0_25, %c0_26, %c0_27], %51 {strides = array<i32>} : memref<3x2x128xi32, #tpu.memory_space<vmem>>, vector<1x2x128xi32>,
    %c3 = arith.constant 3 : index
    %52 = memref.load %arg3[%c3] : memref<9xf32, #tpu.memory_space<smem>>
    %53 = vector.broadcast %52 : f32 to vector<2x128xf32>
    %54 = arith.mulf %53, %14 : vector<2x128xf32>
    %c4 = arith.constant 4 : index
    %55 = memref.load %arg3[%c4] : memref<9xf32, #tpu.memory_space<smem>>
    %56 = vector.broadcast %55 : f32 to vector<2x128xf32>
    %57 = arith.mulf %56, %16 : vector<2x128xf32>
    %58 = arith.addf %54, %57 : vector<2x128xf32>
    %c5 = arith.constant 5 : index
    %59 = memref.load %arg3[%c5] : memref<9xf32, #tpu.memory_space<smem>>
    %60 = vector.broadcast %59 : f32 to vector<2x128xf32>
    %61 = arith.mulf %60, %18 : vector<2x128xf32>
    %62 = arith.addf %58, %61 : vector<2x128xf32>
    %c1_28 = arith.constant 1 : index
    %63 = memref.load %arg4[%c1_28] : memref<3xf32, #tpu.memory_space<smem>>
    %64 = vector.broadcast %63 : f32 to vector<2x128xf32>
    %65 = arith.addf %62, %64 : vector<2x128xf32>
    %cst_29 = arith.constant 0.000000e+00 : f32
    %66 = vector.broadcast %cst_29 : f32 to vector<2x128xf32>
    %67 = arith.maximumf %65, %66 : vector<2x128xf32>
    %c768_i32_30 = arith.constant 768 : i32
    %68 = arith.muli %arg0, %c768_i32_30 : i32
    %c256_i32_31 = arith.constant 256 : i32
    %69 = arith.addi %68, %c256_i32_31 : i32
    %70 = vector.broadcast %69 : i32 to vector<2x128xi32>
    %71 = arith.addi %12, %70 : vector<2x128xi32>
    %c1_32 = arith.constant 1 : index
    %c0_33 = arith.constant 0 : index
    %c0_34 = arith.constant 0 : index
    %72 = vector.load %arg6[%c1_32, %c0_33, %c0_34] : memref<3x2x128xf32, #tpu.memory_space<vmem>>, vector<1x2x128xf32>
    %73 = vector.shape_cast %72 : vector<1x2x128xf32> to vector<2x128xf32>
    %c1_35 = arith.constant 1 : index
    %c0_36 = arith.constant 0 : index
    %c0_37 = arith.constant 0 : index
    %74 = vector.load %arg7[%c1_35, %c0_36, %c0_37] : memref<3x2x128xi32, #tpu.memory_space<vmem>>, vector<1x2x128xi32>
    %75 = vector.shape_cast %74 : vector<1x2x128xi32> to vector<2x128xi32>
    %76 = arith.cmpf ogt, %67, %73 : vector<2x128xf32>
    %77 = arith.select %76, %67, %73 : vector<2x128xi1>, vector<2x128xf32>
    %c1_38 = arith.constant 1 : index
    %c0_39 = arith.constant 0 : index
    %c0_40 = arith.constant 0 : index
    %78 = vector.load %arg6[%c1_38, %c0_39, %c0_40] : memref<3x2x128xf32, #tpu.memory_space<vmem>>, vector<1x2x128xf32>
    %79 = vector.shape_cast %78 : vector<1x2x128xf32> to vector<2x128xf32>
    %80 = vector.shape_cast %77 : vector<2x128xf32> to vector<1x2x128xf32>
    tpu.vector_store %arg6[%c1_38, %c0_39, %c0_40], %80 {strides = array<i32>} : memref<3x2x128xf32, #tpu.memory_space<vmem>>, vector<1x2x128xf32>,
    %81 = arith.select %76, %71, %75 : vector<2x128xi1>, vector<2x128xi32>
    %c1_41 = arith.constant 1 : index
    %c0_42 = arith.constant 0 : index
    %c0_43 = arith.constant 0 : index
    %82 = vector.load %arg7[%c1_41, %c0_42, %c0_43] : memref<3x2x128xi32, #tpu.memory_space<vmem>>, vector<1x2x128xi32>
    %83 = vector.shape_cast %82 : vector<1x2x128xi32> to vector<2x128xi32>
    %84 = vector.shape_cast %81 : vector<2x128xi32> to vector<1x2x128xi32>
    tpu.vector_store %arg7[%c1_41, %c0_42, %c0_43], %84 {strides = array<i32>} : memref<3x2x128xi32, #tpu.memory_space<vmem>>, vector<1x2x128xi32>,
    %c6 = arith.constant 6 : index
    %85 = memref.load %arg3[%c6] : memref<9xf32, #tpu.memory_space<smem>>
    %86 = vector.broadcast %85 : f32 to vector<2x128xf32>
    %87 = arith.mulf %86, %14 : vector<2x128xf32>
    %c7 = arith.constant 7 : index
    %88 = memref.load %arg3[%c7] : memref<9xf32, #tpu.memory_space<smem>>
    %89 = vector.broadcast %88 : f32 to vector<2x128xf32>
    %90 = arith.mulf %89, %16 : vector<2x128xf32>
    %91 = arith.addf %87, %90 : vector<2x128xf32>
    %c8 = arith.constant 8 : index
    %92 = memref.load %arg3[%c8] : memref<9xf32, #tpu.memory_space<smem>>
    %93 = vector.broadcast %92 : f32 to vector<2x128xf32>
    %94 = arith.mulf %93, %18 : vector<2x128xf32>
    %95 = arith.addf %91, %94 : vector<2x128xf32>
    %c2_44 = arith.constant 2 : index
    %96 = memref.load %arg4[%c2_44] : memref<3xf32, #tpu.memory_space<smem>>
    %97 = vector.broadcast %96 : f32 to vector<2x128xf32>
    %98 = arith.addf %95, %97 : vector<2x128xf32>
    %cst_45 = arith.constant 0.000000e+00 : f32
    %99 = vector.broadcast %cst_45 : f32 to vector<2x128xf32>
    %100 = arith.maximumf %98, %99 : vector<2x128xf32>
    %c768_i32_46 = arith.constant 768 : i32
    %101 = arith.muli %arg0, %c768_i32_46 : i32
    %c512_i32 = arith.constant 512 : i32
    %102 = arith.addi %101, %c512_i32 : i32
    %103 = vector.broadcast %102 : i32 to vector<2x128xi32>
    %104 = arith.addi %12, %103 : vector<2x128xi32>
    %c2_47 = arith.constant 2 : index
    %c0_48 = arith.constant 0 : index
    %c0_49 = arith.constant 0 : index
    %105 = vector.load %arg6[%c2_47, %c0_48, %c0_49] : memref<3x2x128xf32, #tpu.memory_space<vmem>>, vector<1x2x128xf32>
    %106 = vector.shape_cast %105 : vector<1x2x128xf32> to vector<2x128xf32>
    %c2_50 = arith.constant 2 : index
    %c0_51 = arith.constant 0 : index
    %c0_52 = arith.constant 0 : index
    %107 = vector.load %arg7[%c2_50, %c0_51, %c0_52] : memref<3x2x128xi32, #tpu.memory_space<vmem>>, vector<1x2x128xi32>
    %108 = vector.shape_cast %107 : vector<1x2x128xi32> to vector<2x128xi32>
    %109 = arith.cmpf ogt, %100, %106 : vector<2x128xf32>
    %110 = arith.select %109, %100, %106 : vector<2x128xi1>, vector<2x128xf32>
    %c2_53 = arith.constant 2 : index
    %c0_54 = arith.constant 0 : index
    %c0_55 = arith.constant 0 : index
    %111 = vector.load %arg6[%c2_53, %c0_54, %c0_55] : memref<3x2x128xf32, #tpu.memory_space<vmem>>, vector<1x2x128xf32>
    %112 = vector.shape_cast %111 : vector<1x2x128xf32> to vector<2x128xf32>
    %113 = vector.shape_cast %110 : vector<2x128xf32> to vector<1x2x128xf32>
    tpu.vector_store %arg6[%c2_53, %c0_54, %c0_55], %113 {strides = array<i32>} : memref<3x2x128xf32, #tpu.memory_space<vmem>>, vector<1x2x128xf32>,
    %114 = arith.select %109, %104, %108 : vector<2x128xi1>, vector<2x128xi32>
    %c2_56 = arith.constant 2 : index
    %c0_57 = arith.constant 0 : index
    %c0_58 = arith.constant 0 : index
    %115 = vector.load %arg7[%c2_56, %c0_57, %c0_58] : memref<3x2x128xi32, #tpu.memory_space<vmem>>, vector<1x2x128xi32>
    %116 = vector.shape_cast %115 : vector<1x2x128xi32> to vector<2x128xi32>
    %117 = vector.shape_cast %114 : vector<2x128xi32> to vector<1x2x128xi32>
    tpu.vector_store %arg7[%c2_56, %c0_57, %c0_58], %117 {strides = array<i32>} : memref<3x2x128xi32, #tpu.memory_space<vmem>>, vector<1x2x128xi32>,
    %c1_i32 = arith.constant 1 : i32
    %118 = arith.cmpi eq, %arg0, %c1_i32 : i32
    %c0_i32_59 = arith.constant 0 : i32
    %119 = arith.cmpi eq, %arg1, %c0_i32_59 : i32
    %120 = arith.andi %118, %119 : i1
    %121 = arith.extui %120 : i1 to i32
    %c0_i32_60 = arith.constant 0 : i32
    %122 = arith.cmpi ne, %121, %c0_i32_60 : i32
    scf.if %122 {
      %c0_61 = arith.constant 0 : index
      %c0_62 = arith.constant 0 : index
      %c0_63 = arith.constant 0 : index
      %123 = vector.load %arg6[%c0_61, %c0_62, %c0_63] : memref<3x2x128xf32, #tpu.memory_space<vmem>>, vector<3x2x128xf32>
      %124 = vector.shape_cast %123 : vector<3x2x128xf32> to vector<1x3x2x128xf32>
      %cst_64 = arith.constant dense<0xFF800000> : vector<1xf32>
      %125 = vector.multi_reduction <maximumf>, %124, %cst_64 [1, 2, 3] : vector<1x3x2x128xf32> to vector<1xf32>
      %126 = vector.shape_cast %125 : vector<1xf32> to vector<1x1x1x1xf32>
      %127 = vector.extract %126[0, 0, 0, 0] : f32 from vector<1x1x1x1xf32>
      %128 = vector.broadcast %127 : f32 to vector<3x2x128xf32>
      %129 = arith.cmpf oeq, %123, %128 : vector<3x2x128xf32>
      %c0_65 = arith.constant 0 : index
      %c0_66 = arith.constant 0 : index
      %c0_67 = arith.constant 0 : index
      %130 = vector.load %arg7[%c0_65, %c0_66, %c0_67] : memref<3x2x128xi32, #tpu.memory_space<vmem>>, vector<3x2x128xi32>
      %c2147483647_i32 = arith.constant 2147483647 : i32
      %131 = vector.broadcast %c2147483647_i32 : i32 to vector<3x2x128xi32>
      %132 = arith.select %129, %130, %131 : vector<3x2x128xi1>, vector<3x2x128xi32>
      %133 = vector.shape_cast %132 : vector<3x2x128xi32> to vector<1x3x2x128xi32>
      %cst_68 = arith.constant dense<2147483647> : vector<1xi32>
      %134 = vector.multi_reduction <minsi>, %133, %cst_68 [1, 2, 3] : vector<1x3x2x128xi32> to vector<1xi32>
      %135 = vector.shape_cast %134 : vector<1xi32> to vector<1x1x1x1xi32>
      %136 = vector.extract %135[0, 0, 0, 0] : i32 from vector<1x1x1x1xi32>
      %c0_69 = arith.constant 0 : index
      %137 = memref.load %arg5[%c0_69] : memref<1xi32, #tpu.memory_space<smem>>
      memref.store %136, %arg5[%c0_69] : memref<1xi32, #tpu.memory_space<smem>>
    } else {
    }
    return
  }
  func.func @transform_0(%arg0: i32, %arg1: i32) -> (i32, i32, i32, i32) {
    %c0_i32 = arith.constant 0 : i32
    %c0_i32_0 = arith.constant 0 : i32
    %c0_i32_1 = arith.constant 0 : i32
    return %arg0, %c0_i32, %arg1, %c0_i32_0 : i32, i32, i32, i32
  }
  func.func @transform_1(%arg0: i32, %arg1: i32) -> i32 {
    %c0_i32 = arith.constant 0 : i32
    %c0_i32_0 = arith.constant 0 : i32
    return %c0_i32 : i32
  }
  func.func @transform_2(%arg0: i32, %arg1: i32) -> i32 {
    %c0_i32 = arith.constant 0 : i32
    %c0_i32_0 = arith.constant 0 : i32
    return %c0_i32 : i32
  }
  func.func @transform_3(%arg0: i32, %arg1: i32) -> i32 {
    %c0_i32 = arith.constant 0 : i32
    %c0_i32_0 = arith.constant 0 : i32
    return %c0_i32 : i32
  }
}

</mosaic_0001>

<llo_original>
// kernel: tpu_custom_call.1
$region0: #{tpu_custom_call.1}
  #allocation0 [shape = 'u32[]', space=smem, size = 0x4, offset = 0x4, fixed_abs, tag = 'smem constant byte address 0x4 - core index']
  #allocation1 [shape = 'u32[144,128]{1,0:T(1,128)}', space=vmem, size = 0x12000, scoped, tag = 'internal scratch']
  #allocation2 [shape = 'f32[3,2,128]{2,1,0:T(2,128)}', space=vmem, size = 0xc00, scoped, tag = 'scratch operand']
  #allocation3 [shape = 's32[3,2,128]{2,1,0:T(2,128)}', space=vmem, size = 0xc00, scoped, tag = 'scratch operand']
  %s0 = inlined_call_operand.hbm [shape: f32[2,3,2,128], index: 0, kind: input, shape index: {}]
  %s1 = inlined_call_operand.vmem [shape: f32[9], index: 1, kind: input, shape index: {}]
  %s2 = inlined_call_operand.vmem [shape: f32[3], index: 2, kind: input, shape index: {}]
  %s3 = inlined_call_operand.hbm [shape: s32[1], index: 3, kind: output, shape index: {}]
  %s4 = sld [smem:[#allocation0]]
  $region65: #{tpu_custom_call.1} parent=0
    _
  %s6 = ssub.s32 1, %s4
  %s7 = scalar_select 0, %s6, %s4
  $region1: #{tpu_custom_call.1} parent=0
    #allocation4 [shape = 'u8[6144]{0}', space=vmem, size = 0x1800, scoped, tag = 'input window, operand 0']
    #allocation5 [shape = 's32[2]{0}', space=sflag, size = 0x8, scoped, tag = 'scoped memory for tpu_custom_call.1']
    #allocation6 [shape = 's32[2]{0}', space=sflag, size = 0x8, scoped, tag = 'scoped memory for tpu_custom_call.1']
    #allocation7 [shape = 's32[2]{0}', space=sflag, size = 0x8, scoped, tag = 'scoped memory for tpu_custom_call.1']
    #allocation8 [shape = 'u8[512]{0}', space=smem, size = 0x200, scoped, tag = 'input window, operand 1, single buffered']
    #allocation9 [shape = 'u8[512]{0}', space=smem, size = 0x200, scoped, tag = 'input window, operand 2, single buffered']
    #allocation10 [shape = 's32[1]{0}', space=sflag, size = 0x4, scoped, tag = 'scoped memory for tpu_custom_call.1']
    #allocation11 [shape = 'u8[512]{0}', space=smem, size = 0x200, scoped, tag = 'output window, operand 0, single buffered']
    %8 = vsyncpa [#allocation5], 0
    %s9 = scalar_lea.sflag [#allocation5], 1
    %10 = vsyncpa %s9, 0
    %11 = vsyncpa [#allocation7], 0
    %12 = vsyncpa [#allocation10], 0
    %13 = vsyncpa [#allocation6], 0
    loop: start=0, step=1, limit=4
    $region2: #{tpu_custom_call.1} parent=1 // loop_pre_header
      _
    $region3: #{tpu_custom_call.1} parent=1 // loop_header
      %s15 = sphi 0, %s19
      %p16 = scmp.ge.s32.totalorder %s15, 4
      %s22 = sphi 0, %s34
      %s23 = sphi 0, %s30
      %s24 = sphi 0, %s22
      %s25 = sphi 0, %s23
      %s26 = sphi 0, %s24
      %s27 = sphi 0, %s25
      %s39 = sphi 0, %s41
      %s42 = sphi 0, %s39
      %s43 = sphi 0, %s42
      %s59 = sphi 0, %s43
      %s63 = sphi 0, %s63
      %s65 = sphi 0, %s63
      %s66 = sphi 0, %s65
      %s80 = sphi 0, %s66
      %s84 = sphi 0, %s84
      %s86 = sphi 0, %s84
      %s87 = sphi 0, %s86
      %s101 = sphi 0, %s87
      %s105 = sphi 0, %s105
      %s107 = sphi 0, %s105
      %s108 = sphi 0, %s107
      %s122 = sphi 0, %s108
    $region4: #{tpu_custom_call.1} parent=1 // loop_header_branch
      %18 = sbr.rel (%p16) target = $region8
    $region5: #{tpu_custom_call.1} parent=1 // loop_body
      %s20 = ssub.s32 %s15, 1
      %s21 = ssub.s32 %s15, 2
      %s28 = sadd.s32 1, %s23
      %p29 = scmp.ge.s32.totalorder %s28, 1
      %s30 = scalar_select %p29, 0, %s28
      %s31 = sadd.s32 1, %s22
      %s32 = scalar_select %p29, %s31, %s22
      %p33 = scmp.ge.s32.totalorder %s32, 2
      %s34 = scalar_select %p33, 0, %s32
      %s35 = ssub.s32 %s22, %s34
      %s36 = ssub.s32 %s23, %s30
      %s37 = sor.u32 %s35, %s36
      %p38 = scmp.eq.s32.totalorder %s37, 0
      %s40 = sadd.s32 %s39, 1
      %s41 = scalar_select %p38, %s39, %s40
      %p44 = pneg %p38
      %p45 = scmp.eq.s32.totalorder %s15, 1
      %p46 = por %p44, %p45
      %p47 = scmp.ne.s32.totalorder %s39, %s42
      %p48 = scmp.eq.s32.totalorder %s15, 0
      %p49 = por %p47, %p48
      %p50 = scmp.ne.s32.totalorder %s39, %s42
      %p51 = scmp.eq.s32.totalorder %s20, 1
      %p52 = por %p50, %p51
      %p53 = scmp.ne.s32.totalorder %s42, %s43
      %p54 = scmp.eq.s32.totalorder %s20, 0
      %p55 = por %p53, %p54
      %p56 = scmp.ne.s32.totalorder %s42, %s43
      %p57 = scmp.eq.s32.totalorder %s21, 1
      %p58 = por %p56, %p57
      %p60 = scmp.ne.s32.totalorder %s43, %s59
      %p61 = scmp.eq.s32.totalorder %s21, 0
      %p62 = por %p60, %p61
      %s64 = sadd.s32 %s63, 1
      %p67 = scmp.eq.s32.totalorder %s15, 1
      %p68 = scmp.ne.s32.totalorder %s63, %s65
      %p69 = scmp.eq.s32.totalorder %s15, 0
      %p70 = por %p68, %p69
      %p71 = scmp.ne.s32.totalorder %s63, %s65
      %p72 = scmp.eq.s32.totalorder %s20, 1
      %p73 = por %p71, %p72
      %p74 = scmp.ne.s32.totalorder %s65, %s66
      %p75 = scmp.eq.s32.totalorder %s20, 0
      %p76 = por %p74, %p75
      %p77 = scmp.ne.s32.totalorder %s65, %s66
      %p78 = scmp.eq.s32.totalorder %s21, 1
      %p79 = por %p77, %p78
      %p81 = scmp.ne.s32.totalorder %s66, %s80
      %p82 = scmp.eq.s32.totalorder %s21, 0
      %p83 = por %p81, %p82
      %s85 = sadd.s32 %s84, 1
      %p88 = scmp.eq.s32.totalorder %s15, 1
      %p89 = scmp.ne.s32.totalorder %s84, %s86
      %p90 = scmp.eq.s32.totalorder %s15, 0
      %p91 = por %p89, %p90
      %p92 = scmp.ne.s32.totalorder %s84, %s86
      %p93 = scmp.eq.s32.totalorder %s20, 1
      %p94 = por %p92, %p93
      %p95 = scmp.ne.s32.totalorder %s86, %s87
      %p96 = scmp.eq.s32.totalorder %s20, 0
      %p97 = por %p95, %p96
      %p98 = scmp.ne.s32.totalorder %s86, %s87
      %p99 = scmp.eq.s32.totalorder %s21, 1
      %p100 = por %p98, %p99
      %p102 = scmp.ne.s32.totalorder %s87, %s101
      %p103 = scmp.eq.s32.totalorder %s21, 0
      %p104 = por %p102, %p103
      %s106 = sadd.s32 %s105, 1
      %p109 = scmp.eq.s32.totalorder %s15, 1
      %p110 = scmp.ne.s32.totalorder %s105, %s107
      %p111 = scmp.eq.s32.totalorder %s15, 0
      %p112 = por %p110, %p111
      %p113 = scmp.ne.s32.totalorder %s105, %s107
      %p114 = scmp.eq.s32.totalorder %s20, 1
      %p115 = por %p113, %p114
      %p116 = scmp.ne.s32.totalorder %s107, %s108
      %p117 = scmp.eq.s32.totalorder %s20, 0
      %p118 = por %p116, %p117
      %p119 = scmp.ne.s32.totalorder %s107, %s108
      %p120 = scmp.eq.s32.totalorder %s21, 1
      %p121 = por %p119, %p120
      %p123 = scmp.ne.s32.totalorder %s108, %s122
      %p124 = scmp.eq.s32.totalorder %s21, 0
      %p125 = por %p123, %p124
      %p126 = scmp.le.s32.totalorder 1, %s15
      %p127 = scmp.lt.s32.totalorder %s15, 3
      %p128 = pnand %p126, %p127
      %p129 = pneg %p128
      // Predicated region
      $region9: #{tpu_custom_call.1} parent=5 // pred_check
        _
      $region10: #{tpu_custom_call.1} parent=5 // pred_check_branch
        %131 = sbr.rel (%p128) target = $region12
      $region11: #{tpu_custom_call.1} parent=5 // pred_region
        %s132 = ssub.s32 %s15, 1
        // Predicated region
        $region13: #{tpu_custom_call.1} parent=11 // pred_check
          %p133 = pneg %p76
        $region14: #{tpu_custom_call.1} parent=11 // pred_check_branch
          %135 = sbr.rel (%p133) target = $region16
        $region15: #{tpu_custom_call.1} parent=11 // pred_region
          %s137 = ssub.s32 16, 16
          %138 = vsyncadd [#allocation7], %s137
          %s140 = sshll.u32 %s1, 4
          %s141 = int_to_ptr.vmem [resolvable:$true] %s140
          %143 = dma.vmem_to_smem %s141, 16, [#allocation8], [#allocation7]
        $region16: #{tpu_custom_call.1} parent=11 // pred_fallthru
          _
        // Predicated region
        $region17: #{tpu_custom_call.1} parent=11 // pred_check
          %p144 = pneg %p97
        $region18: #{tpu_custom_call.1} parent=11 // pred_check_branch
          %146 = sbr.rel (%p144) target = $region20
        $region19: #{tpu_custom_call.1} parent=11 // pred_region
          %s148 = ssub.s32 16, 16
          %149 = vsyncadd [#allocation10], %s148
          %s151 = sshll.u32 %s2, 4
          %s152 = int_to_ptr.vmem [resolvable:$true] %s151
          %154 = dma.vmem_to_smem %s152, 16, [#allocation9], [#allocation10]
        $region20: #{tpu_custom_call.1} parent=11 // pred_fallthru
          _
      $region12: #{tpu_custom_call.1} parent=5 // pred_fallthru
        _
      %p155 = scmp.lt.s32.totalorder %s15, 2
      // Predicated region
      $region21: #{tpu_custom_call.1} parent=5 // pred_check
        %p156 = pneg %p155
      $region22: #{tpu_custom_call.1} parent=5 // pred_check_branch
        %158 = sbr.rel (%p156) target = $region24
      $region23: #{tpu_custom_call.1} parent=5 // pred_region
        // Predicated region
        $region25: #{tpu_custom_call.1} parent=23 // pred_check
          %p159 = pneg %p49
        $region26: #{tpu_custom_call.1} parent=23 // pred_check_branch
          %161 = sbr.rel (%p159) target = $region28
        $region27: #{tpu_custom_call.1} parent=23 // pred_region
          %s162 = sand.u32 %s39, 1
          %s163 = scalar_lea.sflag [#allocation5], %s162
          %s164 = sand.u32 %s39, 1
          %s165 = smul.addr %s164, 6
          %s166 = scalar_lea.vmem [#allocation4], %s165
          %s168 = ssub.s32 96, 96
          %169 = vsyncadd %s163, %s168
          %s170 = smul.addr %s22, 3
          %s171 = sadd.s32 %s23, %s170
          %s172 = smul.addr %s171, 32
          %s173 = scalar_lea.hbm %s0, %s172
          %s174 = sshll.u32 %s166, 4
          %s175 = int_to_ptr.vmem [resolvable:$true] %s174
          %180 = dma.hbm_to_vmem [thread:$0]  %s173, 96, %s175, %s163, 32, 32, 2
        $region28: #{tpu_custom_call.1} parent=23 // pred_fallthru
          _
      $region24: #{tpu_custom_call.1} parent=5 // pred_fallthru
        _
      %p181 = scmp.le.s32.totalorder 1, %s15
      %p182 = scmp.lt.s32.totalorder %s15, 3
      %p183 = pnand %p181, %p182
      %p184 = pneg %p183
      // Predicated region
      $region29: #{tpu_custom_call.1} parent=5 // pred_check
        _
      $region30: #{tpu_custom_call.1} parent=5 // pred_check_branch
        %186 = sbr.rel (%p183) target = $region32
      $region31: #{tpu_custom_call.1} parent=5 // pred_region
        %s187 = ssub.s32 %s15, 1
        %s188 = sand.u32 %s42, 1
        %s189 = scalar_lea.sflag [#allocation5], %s188
        %s190 = sand.u32 %s42, 1
        %s191 = smul.addr %s190, 6
        %s192 = scalar_lea.vmem [#allocation4], %s191
        // Predicated region
        $region33: #{tpu_custom_call.1} parent=31 // pred_check
          %p193 = pneg %p55
        $region34: #{tpu_custom_call.1} parent=31 // pred_check_branch
          %195 = sbr.rel (%p193) target = $region36
        $region35: #{tpu_custom_call.1} parent=31 // pred_region
          %196 = dma.done %s189, 96
        $region36: #{tpu_custom_call.1} parent=31 // pred_fallthru
          _
        // Predicated region
        $region37: #{tpu_custom_call.1} parent=31 // pred_check
          %p197 = pneg %p76
        $region38: #{tpu_custom_call.1} parent=31 // pred_check_branch
          %199 = sbr.rel (%p197) target = $region40
        $region39: #{tpu_custom_call.1} parent=31 // pred_region
          %200 = dma.done [#allocation7], 16
        $region40: #{tpu_custom_call.1} parent=31 // pred_fallthru
          _
        // Predicated region
        $region41: #{tpu_custom_call.1} parent=31 // pred_check
          %p201 = pneg %p97
        $region42: #{tpu_custom_call.1} parent=31 // pred_check_branch
          %203 = sbr.rel (%p201) target = $region44
        $region43: #{tpu_custom_call.1} parent=31 // pred_region
          %204 = dma.done [#allocation10], 16
        $region44: #{tpu_custom_call.1} parent=31 // pred_fallthru
          _
        %205 = sfence
        %s206 = sand.u32 %s42, 1
        %s207 = scalar_lea.sflag [#allocation5], %s206
        %s208 = sand.u32 %s42, 1
        %s209 = smul.addr %s208, 6
        %s210 = scalar_lea.vmem [#allocation4], %s209
        %p211 = pneg %p55
        %p212 = pneg %p52
        %p213 = pneg %p76
        %p214 = pneg %p73
        %p215 = pneg %p97
        %p216 = pneg %p94
        %p217 = pneg %p118
        %p218 = pneg %p115
        %p219 = scmp.eq.s32.totalorder %s24, 0
        %p220 = scmp.eq.s32.totalorder %s25, 0
        %p221 = pnand %p219, %p220
        %p222 = pneg %p221
        // Predicated region
        $region45: #{tpu_custom_call.1} parent=31 // pred_check
          _
        $region46: #{tpu_custom_call.1} parent=31 // pred_check_branch
          %224 = sbr.rel (%p221) target = $region48
        $region47: #{tpu_custom_call.1} parent=31 // pred_region
          %225 = vst [vmem:[#allocation2] sm:$0x3] -inf
          %226 = vst [vmem:[#allocation2 + $0x2] sm:$0x3] -inf
          %227 = vst [vmem:[#allocation2 + $0x4] sm:$0x3] -inf
          %228 = vst [vmem:[#allocation3] sm:$0x3] 0
          %229 = vst [vmem:[#allocation3 + $0x2] sm:$0x3] 0
          %230 = vst [vmem:[#allocation3 + $0x4] sm:$0x3] 0
        $region48: #{tpu_custom_call.1} parent=31 // pred_fallthru
          _
        %v231 = vlaneseq
        %v232 = vshrl.u32 %v231, 7
        %v233 = vmul.u32 %v232, 128
        %v234 = vlaneseq
        %v235 = vand.u32 %v234, 127
        %v236 = vadd.s32 %v233, %v235
        %s237 = smul.u32 %s25, 256
        %v238 = vstv %s237
        %v239 = vadd.s32 %v236, %v238
        %v240 = vld [vmem:[%s192] sm:$0x3]
        %s241 = scalar_lea.vmem %s192, 2 [#allocation4]
        %v242 = vld [vmem:[%s241] sm:$0x3]
        %s243 = scalar_lea.vmem %s192, 4 [#allocation4]
        %v244 = vld [vmem:[%s243] sm:$0x3]
        %s245 = sld [smem:[#allocation8]]
        %v246 = vstv %s245
        %v247 = vmul.f32 %v246, %v240
        %s248 = sld [smem:[#allocation8 + $0x1]]
        %v249 = vstv %s248
        %v250 = vmul.f32 %v249, %v242
        %v251 = vadd.f32 %v247, %v250
        %s252 = sld [smem:[#allocation8 + $0x2]]
        %v253 = vstv %s252
        %v254 = vmul.f32 %v253, %v244
        %v255 = vadd.f32 %v251, %v254
        %s256 = sld [smem:[#allocation9]]
        %v257 = vstv %s256
        %v258 = vadd.f32 %v255, %v257
        %v259 = vmax.f32 %v258, 0.0
        %s260 = smul.u32 %s24, 768
        %v261 = vstv %s260
        %v262 = vadd.s32 %v239, %v261
        %v263 = vld [vmem:[#allocation2] sm:$0x3]
        %v264 = vld [vmem:[#allocation3] sm:$0x3]
        %vm265 = vcmp.gt.f32.partialorder %v259, %v263
        %v266 = vsel %vm265, %v259, %v263
        %267 = vst [vmem:[#allocation2] sm:$0x3] %v266
        %v268 = vsel %vm265, %v262, %v264
        %269 = vst [vmem:[#allocation3] sm:$0x3] %v268
        %s270 = sld [smem:[#allocation8 + $0x3]]
        %v271 = vstv %s270
        %v272 = vmul.f32 %v271, %v240
        %s273 = sld [smem:[#allocation8 + $0x4]]
        %v274 = vstv %s273
        %v275 = vmul.f32 %v274, %v242
        %v276 = vadd.f32 %v272, %v275
        %s277 = sld [smem:[#allocation8 + $0x5]]
        %v278 = vstv %s277
        %v279 = vmul.f32 %v278, %v244
        %v280 = vadd.f32 %v276, %v279
        %s281 = sld [smem:[#allocation9 + $0x1]]
        %v282 = vstv %s281
        %v283 = vadd.f32 %v280, %v282
        %v284 = vmax.f32 %v283, 0.0
        %s285 = sadd.s32 %s260, 256
        %v286 = vstv %s285
        %v287 = vadd.s32 %v239, %v286
        %s288 = scalar_lea.vmem [#allocation2], 2
        %v289 = vld [vmem:[%s288] sm:$0x3]
        %s290 = scalar_lea.vmem [#allocation3], 2
        %v291 = vld [vmem:[%s290] sm:$0x3]
        %vm292 = vcmp.gt.f32.partialorder %v284, %v289
        %v293 = vsel %vm292, %v284, %v289
        %294 = vst [vmem:[%s288] sm:$0x3] %v293
        %v295 = vsel %vm292, %v287, %v291
        %296 = vst [vmem:[%s290] sm:$0x3] %v295
        %s297 = sld [smem:[#allocation8 + $0x6]]
        %v298 = vstv %s297
        %v299 = vmul.f32 %v298, %v240
        %s300 = sld [smem:[#allocation8 + $0x7]]
        %v301 = vstv %s300
        %v302 = vmul.f32 %v301, %v242
        %v303 = vadd.f32 %v299, %v302
        %s304 = sld [smem:[#allocation8 + $0x8]]
        %v305 = vstv %s304
        %v306 = vmul.f32 %v305, %v244
        %v307 = vadd.f32 %v303, %v306
        %s308 = sld [smem:[#allocation9 + $0x2]]
        %v309 = vstv %s308
        %v310 = vadd.f32 %v307, %v309
        %v311 = vmax.f32 %v310, 0.0
        %s312 = sadd.s32 %s260, 512
        %v313 = vstv %s312
        %v314 = vadd.s32 %v239, %v313
        %s315 = scalar_lea.vmem [#allocation2], 4
        %v316 = vld [vmem:[%s315] sm:$0x3]
        %s317 = scalar_lea.vmem [#allocation3], 4
        %v318 = vld [vmem:[%s317] sm:$0x3]
        %vm319 = vcmp.gt.f32.partialorder %v311, %v316
        %v320 = vsel %vm319, %v311, %v316
        %321 = vst [vmem:[%s315] sm:$0x3] %v320
        %v322 = vsel %vm319, %v314, %v318
        %323 = vst [vmem:[%s317] sm:$0x3] %v322
        %p324 = scmp.eq.s32.totalorder %s24, 1
        %p325 = pnand %p324, %p220
        %p326 = pneg %p325
        // Predicated region
        $region49: #{tpu_custom_call.1} parent=31 // pred_check
          _
        $region50: #{tpu_custom_call.1} parent=31 // pred_check_branch
          %328 = sbr.rel (%p325) target = $region52
        $region51: #{tpu_custom_call.1} parent=31 // pred_region
          %v329 = vld [vmem:[#allocation2] sm:$0x3]
          %v330 = vld [vmem:[#allocation2 + $0x2] sm:$0x3]
          %v331 = vld [vmem:[#allocation2 + $0x4] sm:$0x3]
          %vm332 = vcmask 1041408
          %v333 = vsel %vm332, %v329, -inf
          %v334 = vsel %vm332, %v330, -inf
          %v335 = vsel %vm332, %v331, -inf
          %v336 = vmax.f32 %v333, %v334
          %v337 = vmax.f32 %v336, %v335
          %338 = vmax.xlane.f32.xlu0 %v337
          %v339 = vpop.xlane.xlu0 %338
          %v340 = vrot.slane %v339, 4
          %v341 = vmax.f32 %v339, %v340
          %v342 = vrot.slane %v341, 2
          %v343 = vmax.f32 %v341, %v342
          %v344 = vrot.slane %v343, 1
          %v345 = vmax.f32 %v343, %v344
          %s346 = vtos %v345
          %v347 = vstv %s346
          %vm348 = vcmp.eq.f32.partialorder %v329, %v347
          %vm349 = vcmp.eq.f32.partialorder %v330, %v347
          %vm350 = vcmp.eq.f32.partialorder %v331, %v347
          %v351 = vld [vmem:[#allocation3] sm:$0x3]
          %v352 = vld [vmem:[#allocation3 + $0x2] sm:$0x3]
          %v353 = vld [vmem:[#allocation3 + $0x4] sm:$0x3]
          %v354 = vsel %vm348, %v351, 2147483647
          %v355 = vsel %vm349, %v352, 2147483647
          %v356 = vsel %vm350, %v353, 2147483647
          %v357 = vsel %vm332, %v354, 2147483647
          %v358 = vsel %vm332, %v355, 2147483647
          %v359 = vsel %vm332, %v356, 2147483647
          %vm360 = vcmp.lt.s32.totalorder %v357, %v358
          %v361 = vsel %vm360, %v357, %v358
          %vm362 = vcmp.lt.s32.totalorder %v361, %v359
          %v363 = vsel %vm362, %v361, %v359
          %v364 = vand.u32 %v363, 65535
          %v365 = vshra.s32 %v363, 16
          %v366 = vcvt.s32.f32 %v364
          %v367 = vcvt.s32.f32 %v365
          %368 = vmin.xlane.f32.xlu0 %v367
          %v369 = vpop.xlane.xlu0 %368
          %vm370 = vcmp.eq.f32.partialorder %v367, %v369
          %v371 = vsel %vm370, %v366, inf
          %372 = vmin.xlane.f32.xlu0 %v371
          %v373 = vpop.xlane.xlu0 %372
          %v374 = vcvt.f32.s32 %v373
          %v375 = vcvt.f32.s32 %v369
          %v376 = vshll.u32 %v375, 16
          %v377 = vadd.s32 %v376, %v374
          %v378 = vrot.slane %v377, 4
          %vm379 = vcmp.lt.s32.totalorder %v377, %v378
          %v380 = vsel %vm379, %v377, %v378
          %v381 = vrot.slane %v380, 2
          %vm382 = vcmp.lt.s32.totalorder %v380, %v381
          %v383 = vsel %vm382, %v380, %v381
          %v384 = vrot.slane %v383, 1
          %vm385 = vcmp.lt.s32.totalorder %v383, %v384
          %v386 = vsel %vm385, %v383, %v384
          %s387 = vtos %v386
          %s388 = scalar_lea.smem [#allocation11], 0
          %389 = sst [smem:[%s388]] %s387
        $region52: #{tpu_custom_call.1} parent=31 // pred_fallthru
          _
        // Predicated region
        $region53: #{tpu_custom_call.1} parent=31 // pred_check
          %p390 = pneg %p115
        $region54: #{tpu_custom_call.1} parent=31 // pred_check_branch
          %392 = sbr.rel (%p390) target = $region56
        $region55: #{tpu_custom_call.1} parent=31 // pred_region
          %s394 = ssub.s32 16, 16
          %395 = vsyncadd [#allocation6], %s394
          %398 = dma.smem_to_hbm [#allocation11], 16, %s3, [#allocation6]
        $region56: #{tpu_custom_call.1} parent=31 // pred_fallthru
          _
        // Predicated region
        $region57: #{tpu_custom_call.1} parent=31 // pred_check
          %p399 = pneg %p115
        $region58: #{tpu_custom_call.1} parent=31 // pred_check_branch
          %401 = sbr.rel (%p399) target = $region60
        $region59: #{tpu_custom_call.1} parent=31 // pred_region
          %402 = dma.done [#allocation6], 16
        $region60: #{tpu_custom_call.1} parent=31 // pred_fallthru
          _
        %403 = sfence
      $region32: #{tpu_custom_call.1} parent=5 // pred_fallthru
        _
      %p404 = scmp.le.s32.totalorder 2, %s15
      // Predicated region
      $region61: #{tpu_custom_call.1} parent=5 // pred_check
        %p405 = pneg %p404
      $region62: #{tpu_custom_call.1} parent=5 // pred_check_branch
        %407 = sbr.rel (%p405) target = $region64
      $region63: #{tpu_custom_call.1} parent=5 // pred_region
        %s408 = ssub.s32 %s15, 2
      $region64: #{tpu_custom_call.1} parent=5 // pred_fallthru
        _
    $region6: #{tpu_custom_call.1} parent=1 // loop_footer
      %s19 = sadd.s32 1, %s15
    $region7: #{tpu_custom_call.1} parent=1 // loop_footer_branch
      %14 = sbr.rel target = $region3
    $region8: #{tpu_custom_call.1} parent=1 // loop_exit
      _
    %409 = vsyncpa [#allocation5], 1
    %s410 = scalar_lea.sflag [#allocation5], 1
    %411 = vsyncpa %s410, 1
    %412 = vsyncpa [#allocation6], 1
    %s413 = scalar_lea.sflag [#allocation6], 1
    %414 = vsyncpa %s413, 1
    %415 = vsyncpa [#allocation7], 1
    %s416 = scalar_lea.sflag [#allocation7], 1
    %417 = vsyncpa %s416, 1
    %418 = vsyncpa [#allocation10], 1

</llo_original>
